<compile_context>
chip_gen: v5e
topology: v5e:2x2
jax: 0.10.0
libtpu: 0.0.40
codegen_flags: <defaults>
</compile_context>

<pallas_src>
import jax
import jax.numpy as jnp
from jax.experimental import pallas as pl
from jax.experimental.pallas import tpu as pltpu


_MIB = 1024 * 1024
_DEFAULT_BLOCK_CAP = 8 * _MIB      # per-block cap; x2 dbl-buffer x (in+out) = 32 MiB
_DEFAULT_VMEM_LIMIT = 48 * _MIB    # headroom under v7x's 64 MiB physical VMEM
_MIN_EXACT_TILE_BYTES = 512 * 1024  # below this, prefer a big non-dividing tile


def _round_up(a, m):
    return (a + m - 1) // m * m


def _vmem_caps():
    """(block_cap_bytes, vmem_limit_bytes); generation-aware when queryable."""
    block_cap, vmem_limit = _DEFAULT_BLOCK_CAP, _DEFAULT_VMEM_LIMIT
    try:
        phys = getattr(pltpu.get_tpu_info(), "vmem_capacity_bytes", None)
        if phys is not None and phys >= 128 * _MIB:
            # v5e / v6e: 128 MiB physical VMEM -> roomier blocks, fewer grid steps.
            block_cap, vmem_limit = 16 * _MIB, 80 * _MIB
    except Exception:
        pass
    return block_cap, vmem_limit


# ---------------------------------------------------------------------------
# Kernel: pure dense copy — the half-swap lives in the BlockSpec index_maps.
# ---------------------------------------------------------------------------
def _copy_kernel(x_ref, o_ref):
    o_ref[...] = x_ref[...]


def _choose_sh_tile(Sh, itemsize, sub_mult, block_cap):
    """Sublane tile for a (1, sh_tile, 128) block. Returns (sh_tile, n_s) or None."""
    max_sh = block_cap // (128 * itemsize)
    if max_sh < sub_mult:
        return None
    # Whole second dim in one block: legal for any Sh (block == full array dim);
    # padding-aware VMEM check.
    if _round_up(Sh, sub_mult) <= max_sh:
        return Sh, 1
    # Largest divisor of Sh that is a multiple of sub_mult and fits the cap.
    best = 0
    d = 1
    while d * d <= Sh:
        if Sh % d == 0:
            for cand in (d, Sh // d):
                if cand % sub_mult == 0 and cand <= max_sh and cand > best:
                    best = cand
        d += 1
    floor_rows = max(sub_mult, _MIN_EXACT_TILE_BYTES // (128 * itemsize))
    if best >= min(floor_rows, max_sh):
        return best, Sh // best
    # Pathological factorization (e.g. Sh = 8 * prime): use a big tile that does
    # not divide Sh; Pallas masks the partial last block on writeback.
    sh_tile = (max_sh // sub_mult) * sub_mult
    return sh_tile, pl.cdiv(Sh, sh_tile)


# ---------------------------------------------------------------------------
# Pallas wrapper
# ---------------------------------------------------------------------------
def _tuple_flip_pallas(x):
    """Swap the two channel halves of a (B, C, H, W) array (C even) via Pallas."""
    B, C, H, W = x.shape
    if C % 2 != 0:
        return None
    Nh = (C // 2) * H * W                 # elements per channel-half per batch
    if Nh == 0 or Nh % 128 != 0:
        return None                       # not lane-alignable -> XLA fallback
    itemsize = x.dtype.itemsize
    sub_mult = max(8, 32 // itemsize)     # sublane packing: 8 f32 / 16 bf16 / 32 int8
    Sh = Nh // 128

    block_cap, vmem_limit = _vmem_caps()
    tile = _choose_sh_tile(Sh, itemsize, sub_mult, block_cap)
    if tile is None:
        return None
    sh_tile, n_s = tile

    # Free, contiguous reshape: row r = 2*b + half.  Swapping the channel halves
    # of batch b is exactly swapping rows 2b <-> 2b+1, i.e. out row = in row ^ 1.
    x3 = x.reshape(2 * B, Sh, 128)

    out3 = pl.pallas_call(
        _copy_kernel,
        out_shape=jax.ShapeDtypeStruct((2 * B, Sh, 128), x.dtype),
        grid=(2 * B, n_s),
        in_specs=[pl.BlockSpec((1, sh_tile, 128), lambda r, s: (r, s, 0))],
        out_specs=pl.BlockSpec((1, sh_tile, 128), lambda r, s: (r ^ 1, s, 0)),
        compiler_params=pltpu.CompilerParams(
            dimension_semantics=("parallel", "parallel"),
            vmem_limit_bytes=vmem_limit,
        ),
    )(x3)
    return out3.reshape(B, C, H, W)


# ---------------------------------------------------------------------------
# Pure-JAX reference / fallback (faithful to torch.chunk semantics, incl. odd C).
# ---------------------------------------------------------------------------
def _tuple_flip_ref(x, reverse=False):
    C = x.shape[1]
    c_first = (C + 1) // 2  # torch.chunk: first chunk gets the ceil
    if not reverse:
        z1, z2 = x[:, :c_first], x[:, c_first:]
        return jnp.concatenate([z2, z1], axis=1)
    else:
        z2, z1 = x[:, :c_first], x[:, c_first:]
        return jnp.concatenate([z1, z2], axis=1)


class TupleFlip:
    """Pallas equivalent of the PyTorch TupleFlip (no learnable parameters)."""

    def forward(self, z, logdet=0.0, reverse=False):
        C = z.shape[1]
        if C % 2 == 0:
            # Even channel count: forward and reverse are the identical swap.
            out = _tuple_flip_pallas(z)
            if out is not None:
                return out, logdet
        # Fallback: odd channels or shapes that can't be made lane-dense.
        return _tuple_flip_ref(z, reverse=reverse), logdet

    __call__ = forward


if __name__ == "__main__":
    key = jax.random.PRNGKey(0)
    B, C, H, W = 2, 4, 16, 16
    x = jax.random.normal(key, (B, C, H, W), dtype=jnp.float32)

    layer = TupleFlip()

    out, logdet = layer(x, logdet=0.0, reverse=False)
    out = jax.block_until_ready(out)
    expected = _tuple_flip_ref(x, reverse=False)
    assert out.shape == x.shape, out.shape
    assert out.dtype == x.dtype
    assert jnp.array_equal(out, expected), "Pallas TupleFlip forward mismatch"
    assert logdet == 0.0

    out_rev, _ = layer(x, logdet=0.0, reverse=True)
    out_rev = jax.block_until_ready(out_rev)
    expected_rev = _tuple_flip_ref(x, reverse=True)
    assert jnp.array_equal(out_rev, expected_rev), "Pallas TupleFlip reverse mismatch"

    # Round-trip: reverse undoes forward (even C).
    rt, _ = layer(out, logdet=0.0, reverse=True)
    assert jnp.array_equal(jax.block_until_ready(rt), x), "round-trip mismatch"

    # bf16 path with a larger sublane tile (Sh = 128 -> (1, 128, 128) blocks).
    x2 = jax.random.normal(jax.random.PRNGKey(1), (2, 8, 32, 128),
                           dtype=jnp.float32).astype(jnp.bfloat16)
    o2, _ = layer(x2, logdet=0.0, reverse=False)
    o2 = jax.block_until_ready(o2)
    assert jnp.array_equal(o2, _tuple_flip_ref(x2)), "bf16 TupleFlip mismatch"

    print("KERNEL_OK")
</pallas_src>

<mosaic_0001>
module attributes {stable_mosaic.version = 11 : i64} {
  func.func @_copy_kernel(%arg0: i32, %arg1: i32, %arg2: memref<1x4x128xf32, #tpu.memory_space<vmem>>, %arg3: memref<1x4x128xf32, #tpu.memory_space<vmem>>) attributes {dimension_semantics = [#tpu.dimension_semantics<parallel>, #tpu.dimension_semantics<parallel>], iteration_bounds = array<i64: 4, 1>, scalar_prefetch = 0 : i64, scratch_operands = 0 : i64, tpu.core_type = #tpu.core_type<tc>, window_params = [{transform_indices = @transform_0, window_bounds = array<i64: 1, 4, 128>}, {transform_indices = @transform_1, window_bounds = array<i64: 1, 4, 128>}]} {
    %c0 = arith.constant 0 : index
    %c0_0 = arith.constant 0 : index
    %c0_1 = arith.constant 0 : index
    %0 = vector.load %arg2[%c0, %c0_0, %c0_1] : memref<1x4x128xf32, #tpu.memory_space<vmem>>, vector<1x4x128xf32>
    %c0_2 = arith.constant 0 : index
    %c0_3 = arith.constant 0 : index
    %c0_4 = arith.constant 0 : index
    %1 = vector.load %arg3[%c0_2, %c0_3, %c0_4] : memref<1x4x128xf32, #tpu.memory_space<vmem>>, vector<1x4x128xf32>
    tpu.vector_store %arg3[%c0_2, %c0_3, %c0_4], %0 {strides = array<i32>} : memref<1x4x128xf32, #tpu.memory_space<vmem>>, vector<1x4x128xf32>,
    return
  }
  func.func @transform_0(%arg0: i32, %arg1: i32) -> (i32, i32, i32) {
    %c0_i32 = arith.constant 0 : i32
    %c0_i32_0 = arith.constant 0 : i32
    return %arg0, %arg1, %c0_i32 : i32, i32, i32
  }
  func.func @transform_1(%arg0: i32, %arg1: i32) -> (i32, i32, i32) {
    %c1_i32 = arith.constant 1 : i32
    %0 = arith.xori %arg0, %c1_i32 : i32
    %c0_i32 = arith.constant 0 : i32
    %c0_i32_0 = arith.constant 0 : i32
    return %0, %arg1, %c0_i32 : i32, i32, i32
  }
}

</mosaic_0001>

<llo_original>
// kernel: tpu_custom_call.1
$region0: #{tpu_custom_call.1}
  #allocation0 [shape = 'u32[]', space=smem, size = 0x4, offset = 0x4, fixed_abs, tag = 'smem constant byte address 0x4 - core index']
  #allocation1 [shape = 'u32[72,128]{1,0:T(1,128)}', space=vmem, size = 0x9000, scoped, tag = 'internal scratch']
  %s0 = inlined_call_operand.hbm [shape: f32[4,4,128], index: 0, kind: input, shape index: {}]
  %s1 = inlined_call_operand.hbm [shape: f32[4,4,128], index: 1, kind: output, shape index: {}]
  %s2 = sld [smem:[#allocation0]]
  $region41: #{tpu_custom_call.1} parent=0
    _
  %s4 = ssub.s32 1, %s2
  %s5 = scalar_select 0, %s4, %s2
  $region1: #{tpu_custom_call.1} parent=0
    #allocation2 [shape = 'u8[4096]{0}', space=vmem, size = 0x1000, scoped, tag = 'input window, operand 0']
    #allocation3 [shape = 's32[2]{0}', space=sflag, size = 0x8, scoped, tag = 'scoped memory for tpu_custom_call.1']
    #allocation4 [shape = 's32[2]{0}', space=sflag, size = 0x8, scoped, tag = 'scoped memory for tpu_custom_call.1']
    #allocation5 [shape = 'u8[4096]{0}', space=vmem, size = 0x1000, scoped, tag = 'output window, operand 0']
    %6 = vsyncpa [#allocation3], 0
    %s7 = scalar_lea.sflag [#allocation3], 1
    %8 = vsyncpa %s7, 0
    %9 = vsyncpa [#allocation4], 0
    %s10 = scalar_lea.sflag [#allocation4], 1
    %11 = vsyncpa %s10, 0
    loop: start=0, step=1, limit=6
    $region2: #{tpu_custom_call.1} parent=1 // loop_pre_header
      _
    $region3: #{tpu_custom_call.1} parent=1 // loop_header
      %s13 = sphi 0, %s17
      %p14 = scmp.ge.s32.totalorder %s13, 6
      %s20 = sphi 0, %s32
      %s21 = sphi 0, %s28
      %s22 = sphi 0, %s20
      %s23 = sphi 0, %s21
      %s24 = sphi 0, %s22
      %s25 = sphi 0, %s23
      %s37 = sphi 0, %s39
      %s40 = sphi 0, %s37
      %s41 = sphi 0, %s40
      %s57 = sphi 0, %s41
      %s67 = sphi 0, %s69
      %s70 = sphi 0, %s67
      %s71 = sphi 0, %s70
      %s87 = sphi 0, %s71
    $region4: #{tpu_custom_call.1} parent=1 // loop_header_branch
      %16 = sbr.rel (%p14) target = $region8
    $region5: #{tpu_custom_call.1} parent=1 // loop_body
      %s18 = ssub.s32 %s13, 1
      %s19 = ssub.s32 %s13, 2
      %s26 = sadd.s32 1, %s21
      %p27 = scmp.ge.s32.totalorder %s26, 1
      %s28 = scalar_select %p27, 0, %s26
      %s29 = sadd.s32 1, %s20
      %s30 = scalar_select %p27, %s29, %s20
      %p31 = scmp.ge.s32.totalorder %s30, 4
      %s32 = scalar_select %p31, 0, %s30
      %s33 = ssub.s32 %s20, %s32
      %s34 = ssub.s32 %s21, %s28
      %s35 = sor.u32 %s33, %s34
      %p36 = scmp.eq.s32.totalorder %s35, 0
      %s38 = sadd.s32 %s37, 1
      %s39 = scalar_select %p36, %s37, %s38
      %p42 = pneg %p36
      %p43 = scmp.eq.s32.totalorder %s13, 3
      %p44 = por %p42, %p43
      %p45 = scmp.ne.s32.totalorder %s37, %s40
      %p46 = scmp.eq.s32.totalorder %s13, 0
      %p47 = por %p45, %p46
      %p48 = scmp.ne.s32.totalorder %s37, %s40
      %p49 = scmp.eq.s32.totalorder %s18, 3
      %p50 = por %p48, %p49
      %p51 = scmp.ne.s32.totalorder %s40, %s41
      %p52 = scmp.eq.s32.totalorder %s18, 0
      %p53 = por %p51, %p52
      %p54 = scmp.ne.s32.totalorder %s40, %s41
      %p55 = scmp.eq.s32.totalorder %s19, 3
      %p56 = por %p54, %p55
      %p58 = scmp.ne.s32.totalorder %s41, %s57
      %p59 = scmp.eq.s32.totalorder %s19, 0
      %p60 = por %p58, %p59
      %s61 = sxor.u32 %s20, 1
      %s62 = sxor.u32 %s32, 1
      %s63 = ssub.s32 %s61, %s62
      %s64 = ssub.s32 %s21, %s28
      %s65 = sor.u32 %s63, %s64
      %p66 = scmp.eq.s32.totalorder %s65, 0
      %s68 = sadd.s32 %s67, 1
      %s69 = scalar_select %p66, %s67, %s68
      %p72 = pneg %p66
      %p73 = scmp.eq.s32.totalorder %s13, 3
      %p74 = por %p72, %p73
      %p75 = scmp.ne.s32.totalorder %s67, %s70
      %p76 = scmp.eq.s32.totalorder %s13, 0
      %p77 = por %p75, %p76
      %p78 = scmp.ne.s32.totalorder %s67, %s70
      %p79 = scmp.eq.s32.totalorder %s18, 3
      %p80 = por %p78, %p79
      %p81 = scmp.ne.s32.totalorder %s70, %s71
      %p82 = scmp.eq.s32.totalorder %s18, 0
      %p83 = por %p81, %p82
      %p84 = scmp.ne.s32.totalorder %s70, %s71
      %p85 = scmp.eq.s32.totalorder %s19, 3
      %p86 = por %p84, %p85
      %p88 = scmp.ne.s32.totalorder %s71, %s87
      %p89 = scmp.eq.s32.totalorder %s19, 0
      %p90 = por %p88, %p89
      %p91 = scmp.le.s32.totalorder 1, %s13
      %p92 = scmp.lt.s32.totalorder %s13, 5
      %p93 = pnand %p91, %p92
      %p94 = pneg %p93
      // Predicated region
      $region9: #{tpu_custom_call.1} parent=5 // pred_check
        _
      $region10: #{tpu_custom_call.1} parent=5 // pred_check_branch
        %96 = sbr.rel (%p93) target = $region12
      $region11: #{tpu_custom_call.1} parent=5 // pred_region
        %s97 = ssub.s32 %s13, 1
      $region12: #{tpu_custom_call.1} parent=5 // pred_fallthru
        _
      %p98 = scmp.lt.s32.totalorder %s13, 4
      // Predicated region
      $region13: #{tpu_custom_call.1} parent=5 // pred_check
        %p99 = pneg %p98
      $region14: #{tpu_custom_call.1} parent=5 // pred_check_branch
        %101 = sbr.rel (%p99) target = $region16
      $region15: #{tpu_custom_call.1} parent=5 // pred_region
        // Predicated region
        $region17: #{tpu_custom_call.1} parent=15 // pred_check
          %p102 = pneg %p47
        $region18: #{tpu_custom_call.1} parent=15 // pred_check_branch
          %104 = sbr.rel (%p102) target = $region20
        $region19: #{tpu_custom_call.1} parent=15 // pred_region
          %s105 = sand.u32 %s37, 1
          %s106 = scalar_lea.sflag [#allocation3], %s105
          %s107 = sand.u32 %s37, 1
          %s108 = smul.addr %s107, 4
          %s109 = scalar_lea.vmem [#allocation2], %s108
          %111 = vsyncadd %s106, 0
          %s112 = sadd.s32 %s21, %s20
          %s113 = smul.addr %s112, 4
          %s114 = scalar_lea.hbm %s0, %s113
          %s116 = sshll.u32 %s114, 4
          %s117 = int_to_ptr.hbm [resolvable:$true] %s116
          %s118 = sshll.u32 %s109, 4
          %s119 = int_to_ptr.vmem [resolvable:$true] %s118
          %121 = dma.hbm_to_vmem [thread:$0]  %s117, 64, %s119, %s106
        $region20: #{tpu_custom_call.1} parent=15 // pred_fallthru
          _
      $region16: #{tpu_custom_call.1} parent=5 // pred_fallthru
        _
      %p122 = scmp.le.s32.totalorder 1, %s13
      %p123 = scmp.lt.s32.totalorder %s13, 5
      %p124 = pnand %p122, %p123
      %p125 = pneg %p124
      // Predicated region
      $region21: #{tpu_custom_call.1} parent=5 // pred_check
        _
      $region22: #{tpu_custom_call.1} parent=5 // pred_check_branch
        %127 = sbr.rel (%p124) target = $region24
      $region23: #{tpu_custom_call.1} parent=5 // pred_region
        %s128 = ssub.s32 %s13, 1
        %s129 = sand.u32 %s40, 1
        %s130 = scalar_lea.sflag [#allocation3], %s129
        %s131 = sand.u32 %s40, 1
        %s132 = smul.addr %s131, 4
        %s133 = scalar_lea.vmem [#allocation2], %s132
        // Predicated region
        $region25: #{tpu_custom_call.1} parent=23 // pred_check
          %p134 = pneg %p53
        $region26: #{tpu_custom_call.1} parent=23 // pred_check_branch
          %136 = sbr.rel (%p134) target = $region28
        $region27: #{tpu_custom_call.1} parent=23 // pred_region
          %138 = dma.done %s130, 64
        $region28: #{tpu_custom_call.1} parent=23 // pred_fallthru
          _
        %s139 = sand.u32 %s40, 1
        %s140 = scalar_lea.sflag [#allocation3], %s139
        %s141 = sand.u32 %s40, 1
        %s142 = smul.addr %s141, 4
        %s143 = scalar_lea.vmem [#allocation2], %s142
        %p144 = pneg %p53
        %p145 = pneg %p50
        %p146 = pneg %p83
        %p147 = pneg %p80
        %s148 = sand.u32 %s70, 1
        %s149 = scalar_lea.sflag [#allocation4], %s148
        %s150 = sand.u32 %s70, 1
        %s151 = smul.addr %s150, 4
        %s152 = scalar_lea.vmem [#allocation5], %s151
        %s153 = sxor.u32 %s22, 1
        %v154 = vld [vmem:[%s133] sm:$0xf]
        %155 = vst [vmem:[%s152] sm:$0xf] %v154
        %s156 = sand.u32 %s70, 1
        %s157 = scalar_lea.sflag [#allocation4], %s156
        %s158 = sand.u32 %s70, 1
        %s159 = smul.addr %s158, 4
        %s160 = scalar_lea.vmem [#allocation5], %s159
        // Predicated region
        $region29: #{tpu_custom_call.1} parent=23 // pred_check
          %p161 = pneg %p80
        $region30: #{tpu_custom_call.1} parent=23 // pred_check_branch
          %163 = sbr.rel (%p161) target = $region32
        $region31: #{tpu_custom_call.1} parent=23 // pred_region
          %s164 = sxor.u32 %s22, 1
          %166 = vsyncadd %s157, 0
          %s167 = sadd.s32 %s23, %s164
          %s168 = smul.addr %s167, 4
          %s169 = scalar_lea.hbm %s1, %s168
          %s171 = sshll.u32 %s160, 4
          %s172 = int_to_ptr.vmem [resolvable:$true] %s171
          %s173 = sshll.u32 %s169, 4
          %s174 = int_to_ptr.hbm [resolvable:$true] %s173
          %176 = dma.vmem_to_hbm [thread:$0]  %s172, 64, %s174, %s157
        $region32: #{tpu_custom_call.1} parent=23 // pred_fallthru
          _
      $region24: #{tpu_custom_call.1} parent=5 // pred_fallthru
        _
      %p177 = scmp.le.s32.totalorder 2, %s13
      // Predicated region
      $region33: #{tpu_custom_call.1} parent=5 // pred_check
        %p178 = pneg %p177
      $region34: #{tpu_custom_call.1} parent=5 // pred_check_branch
        %180 = sbr.rel (%p178) target = $region36
      $region35: #{tpu_custom_call.1} parent=5 // pred_region
        %s181 = ssub.s32 %s13, 2
        // Predicated region
        $region37: #{tpu_custom_call.1} parent=35 // pred_check
          %p182 = pneg %p86
        $region38: #{tpu_custom_call.1} parent=35 // pred_check_branch
          %184 = sbr.rel (%p182) target = $region40
        $region39: #{tpu_custom_call.1} parent=35 // pred_region
          %s185 = sand.u32 %s71, 1
          %s186 = scalar_lea.sflag [#allocation4], %s185
          %s187 = sand.u32 %s71, 1
          %s188 = smul.addr %s187, 4
          %s189 = scalar_lea.vmem [#allocation5], %s188
          %191 = dma.done %s186, 64
        $region40: #{tpu_custom_call.1} parent=35 // pred_fallthru
          _
      $region36: #{tpu_custom_call.1} parent=5 // pred_fallthru
        _
    $region6: #{tpu_custom_call.1} parent=1 // loop_footer
      %s17 = sadd.s32 1, %s13
    $region7: #{tpu_custom_call.1} parent=1 // loop_footer_branch
      %12 = sbr.rel target = $region3
    $region8: #{tpu_custom_call.1} parent=1 // loop_exit
      _
    %192 = vsyncpa [#allocation3], 1
    %s193 = scalar_lea.sflag [#allocation3], 1
    %194 = vsyncpa %s193, 1
    %195 = vsyncpa [#allocation4], 1
    %s196 = scalar_lea.sflag [#allocation4], 1
    %197 = vsyncpa %s196, 1

</llo_original>
